<compile_context>
chip_gen: v5e
topology: v5e:2x2
jax: 0.10.0
libtpu: 0.0.40
codegen_flags: <defaults>
</compile_context>

<pallas_src>
import numpy as np
import jax
import jax.numpy as jnp
from jax.experimental import pallas as pl
from jax.experimental.pallas import tpu as pltpu


def _round_up(x, m):
    return ((x + m - 1) // m) * m


# ---------------------------------------------------------------------------
# Topology helpers (plain Python, mirror the PyTorch module's __init__ logic).
# ---------------------------------------------------------------------------
def calculate_degree(topology):
    joint_num = len(topology)
    matrix = [[0] * joint_num for _ in range(joint_num)]
    for i, j in enumerate(list(topology)):
        matrix[i][int(j)] = matrix[int(j)][i] = 1
    for i in range(joint_num):
        matrix[i][i] = 0
    return [sum(row) for row in matrix]


def pool_seq(degree):
    num_joint = len(degree)
    seq_list = [[]]
    for joint_idx in range(1, num_joint):
        if degree[joint_idx] == 2:
            seq_list[-1].append(joint_idx)
        else:
            seq_list[-1].append(joint_idx)
            seq_list.append([])
            continue
    return [each for each in seq_list if len(each) != 0]


def get_merge_pairs(topology):
    degree = calculate_degree(topology)
    pooling_seq = pool_seq(degree)
    merge_pair_list = []
    for seq in pooling_seq:
        if len(seq) == 1:
            merge_pair_list.append([seq[0]])
        else:
            for i in range(0, len(seq), 2):
                if i + 1 < len(seq):
                    merge_pair_list.append([seq[i], seq[i + 1]])
                else:
                    merge_pair_list.append([seq[i]])
    return merge_pair_list


# ---------------------------------------------------------------------------
# Pallas kernel: 2-D lane-dense blocks, pooling as unrolled static lane windows.
# ---------------------------------------------------------------------------
def _make_pool_kernel(merge_pairs, T, avg_in_f32):
    merge_pairs = tuple(tuple(int(i) for i in p) for p in merge_pairs)

    def kernel(x_ref, o_ref):
        # x_ref: (g_tile, Jo*T) block,  o_ref: (g_tile, Jn*T) block.
        # G on sublanes, joints*time on lanes -> lane-dense loads/stores.
        # Root joint passthrough.
        o_ref[:, pl.ds(0, T)] = x_ref[:, pl.ds(0, T)].astype(o_ref.dtype)
        # Merged joints: equal-weight average of their pair (1 or 2 joints).
        for n, pair in enumerate(merge_pairs):
            dst = pl.ds((n + 1) * T, T)
            if len(pair) == 1:
                o_ref[:, dst] = x_ref[:, pl.ds(pair[0] * T, T)].astype(o_ref.dtype)
            else:
                acc_dtype = jnp.float32 if avg_in_f32 else o_ref.dtype
                acc = x_ref[:, pl.ds(pair[0] * T, T)].astype(acc_dtype)
                for idx in pair[1:]:
                    acc = acc + x_ref[:, pl.ds(idx * T, T)].astype(acc_dtype)
                acc = acc * jnp.asarray(1.0 / len(pair), dtype=acc_dtype)
                o_ref[:, dst] = acc.astype(o_ref.dtype)

    return kernel


def skeleton_pool(x, merge_pairs, *,
                  vmem_block_budget_bytes=6 * 1024 * 1024,   # per-step (in+out)
                  vmem_limit_bytes=32 * 1024 * 1024,         # explicit scoped limit
                  min_grid_steps=8):
    """x: (B, C, J_old, T) array (native dtype) -> (B, C, J_new, T)."""
    B, C, Jo, T = x.shape
    Jn = 1 + len(merge_pairs)
    G = B * C

    # Free reshapes: merge (B, C) and flatten (J, T) onto the lane axis.
    xg = x.reshape(G, Jo * T)

    itemsize = jnp.dtype(x.dtype).itemsize
    # Sublane pack (rows per vreg): 8 for f32, 16 for bf16, 32 for int8.
    sub = 8 * max(1, 4 // itemsize)

    # Padded VMEM bytes for one sublane group (sub rows) of input + output
    # blocks, accounting for (sublane, 128) lane tiling.
    lanes_in = _round_up(Jo * T, 128)
    lanes_out = _round_up(Jn * T, 128)
    bytes_per_group = sub * (lanes_in + lanes_out) * itemsize

    groups_total = pl.cdiv(G, sub)
    groups_budget = max(1, vmem_block_budget_bytes // bytes_per_group)
    # Keep at least `min_grid_steps` grid steps so the BlockSpec double-buffer
    # overlaps DMA/compute and v7x can shard the grid over both TensorCores.
    groups_target = max(1, -(-groups_total // min_grid_steps))
    groups_tile = max(1, min(groups_total, groups_budget, groups_target))

    g_tile = min(G, groups_tile * sub)
    # Keep the sublane axis aligned unless one block covers all of G.
    if g_tile != G:
        g_tile = max(sub, (g_tile // sub) * sub)

    grid = (pl.cdiv(G, g_tile),)   # ragged last block handled by Pallas masking

    # Pair-average dtype: f32 for f32 inputs and on v5e (no bf16 VPU); native
    # bf16 on v6e/v7x halves vreg traffic in the unrolled joint loop.
    avg_in_f32 = True
    if x.dtype == jnp.bfloat16:
        try:
            kind = jax.devices()[0].device_kind.lower()
            avg_in_f32 = "v5" in kind
        except Exception:
            avg_in_f32 = True

    kernel = _make_pool_kernel(merge_pairs, T, avg_in_f32)

    cost = pl.CostEstimate(
        flops=2 * G * Jo * T,                              # adds + scale per pair
        transcendentals=0,
        bytes_accessed=G * (Jo + Jn) * T * itemsize,       # pure streaming op
    )

    out = pl.pallas_call(
        kernel,
        out_shape=jax.ShapeDtypeStruct((G, Jn * T), x.dtype),
        grid_spec=pltpu.PrefetchScalarGridSpec(
            num_scalar_prefetch=0,
            grid=grid,
            in_specs=[
                # Only the G axis is tiled; the full lane-flattened face per block.
                pl.BlockSpec((g_tile, Jo * T), lambda g: (g, 0)),
            ],
            out_specs=pl.BlockSpec((g_tile, Jn * T), lambda g: (g, 0)),
        ),
        compiler_params=pltpu.CompilerParams(
            dimension_semantics=("parallel",),
            vmem_limit_bytes=int(vmem_limit_bytes),
        ),
        cost_estimate=cost,
    )(xg)

    return out.reshape(B, C, Jn, T)   # free reshape back


# Pure-JAX reference reproducing the PyTorch forward exactly.
def skeleton_pool_ref(x, merge_pairs):
    results = [x[:, :, 0:1, :]]
    for pair in merge_pairs:
        merged = jnp.stack([x[:, :, idx:idx + 1, :] for idx in pair], axis=2)
        results.append(jnp.mean(merged, axis=2))
    return jnp.concatenate(results, axis=2)


if __name__ == "__main__":
    # Small skeleton: root with three chains (branching joint has degree 3).
    #   parents: joint i -> topology[i]
    topology = np.array([0, 0, 1, 2, 0, 4, 5, 0, 7], dtype=np.int64)  # 9 joints
    merge_pairs = get_merge_pairs(topology)   # [[1,2],[3],[4,5],[6],[7,8]]
    new_joint_num = 1 + len(merge_pairs)      # 6

    B, C, Jo, T = 2, 4, len(topology), 16
    key = jax.random.PRNGKey(0)
    x = jax.random.normal(key, (B, C, Jo, T), dtype=jnp.float32)

    out = skeleton_pool(x, merge_pairs)
    out = jax.block_until_ready(out)

    assert out.shape == (B, C, new_joint_num, T), out.shape
    ref = skeleton_pool_ref(x, merge_pairs)
    np.testing.assert_allclose(np.asarray(out), np.asarray(ref),
                               rtol=1e-5, atol=1e-5)

    print("KERNEL_OK")
</pallas_src>

<mosaic_0001>
module attributes {stable_mosaic.version = 11 : i64} {
  func.func @kernel(%arg0: i32, %arg1: memref<8x144xf32, #tpu.memory_space<vmem>>, %arg2: memref<8x96xf32, #tpu.memory_space<vmem>>) attributes {dimension_semantics = [#tpu.dimension_semantics<parallel>], iteration_bounds = array<i64: 1>, scalar_prefetch = 0 : i64, scratch_operands = 0 : i64, tpu.core_type = #tpu.core_type<tc>, window_params = [{transform_indices = @transform_0, window_bounds = array<i64: 8, 144>}, {transform_indices = @transform_1, window_bounds = array<i64: 8, 96>}]} {
    %c0 = arith.constant 0 : index
    %c0_0 = arith.constant 0 : index
    %0 = vector.load %arg1[%c0, %c0_0] : memref<8x144xf32, #tpu.memory_space<vmem>>, vector<8x16xf32>
    %c0_1 = arith.constant 0 : index
    %c0_2 = arith.constant 0 : index
    %1 = vector.load %arg2[%c0_1, %c0_2] : memref<8x96xf32, #tpu.memory_space<vmem>>, vector<8x16xf32>
    tpu.vector_store %arg2[%c0_1, %c0_2], %0 {strides = array<i32>} : memref<8x96xf32, #tpu.memory_space<vmem>>, vector<8x16xf32>,
    %c0_3 = arith.constant 0 : index
    %c16 = arith.constant 16 : index
    %2 = vector.load %arg1[%c0_3, %c16] : memref<8x144xf32, #tpu.memory_space<vmem>>, vector<8x16xf32>
    %c0_4 = arith.constant 0 : index
    %c32 = arith.constant 32 : index
    %3 = vector.load %arg1[%c0_4, %c32] : memref<8x144xf32, #tpu.memory_space<vmem>>, vector<8x16xf32>
    %4 = arith.addf %2, %3 : vector<8x16xf32>
    %cst = arith.constant 5.000000e-01 : f32
    %5 = vector.broadcast %cst : f32 to vector<8x16xf32>
    %6 = arith.mulf %4, %5 : vector<8x16xf32>
    %c0_5 = arith.constant 0 : index
    %c16_6 = arith.constant 16 : index
    %7 = vector.load %arg2[%c0_5, %c16_6] : memref<8x96xf32, #tpu.memory_space<vmem>>, vector<8x16xf32>
    tpu.vector_store %arg2[%c0_5, %c16_6], %6 {strides = array<i32>} : memref<8x96xf32, #tpu.memory_space<vmem>>, vector<8x16xf32>,
    %c0_7 = arith.constant 0 : index
    %c48 = arith.constant 48 : index
    %8 = vector.load %arg1[%c0_7, %c48] : memref<8x144xf32, #tpu.memory_space<vmem>>, vector<8x16xf32>
    %c0_8 = arith.constant 0 : index
    %c32_9 = arith.constant 32 : index
    %9 = vector.load %arg2[%c0_8, %c32_9] : memref<8x96xf32, #tpu.memory_space<vmem>>, vector<8x16xf32>
    tpu.vector_store %arg2[%c0_8, %c32_9], %8 {strides = array<i32>} : memref<8x96xf32, #tpu.memory_space<vmem>>, vector<8x16xf32>,
    %c0_10 = arith.constant 0 : index
    %c64 = arith.constant 64 : index
    %10 = vector.load %arg1[%c0_10, %c64] : memref<8x144xf32, #tpu.memory_space<vmem>>, vector<8x16xf32>
    %c0_11 = arith.constant 0 : index
    %c80 = arith.constant 80 : index
    %11 = vector.load %arg1[%c0_11, %c80] : memref<8x144xf32, #tpu.memory_space<vmem>>, vector<8x16xf32>
    %12 = arith.addf %10, %11 : vector<8x16xf32>
    %cst_12 = arith.constant 5.000000e-01 : f32
    %13 = vector.broadcast %cst_12 : f32 to vector<8x16xf32>
    %14 = arith.mulf %12, %13 : vector<8x16xf32>
    %c0_13 = arith.constant 0 : index
    %c48_14 = arith.constant 48 : index
    %15 = vector.load %arg2[%c0_13, %c48_14] : memref<8x96xf32, #tpu.memory_space<vmem>>, vector<8x16xf32>
    tpu.vector_store %arg2[%c0_13, %c48_14], %14 {strides = array<i32>} : memref<8x96xf32, #tpu.memory_space<vmem>>, vector<8x16xf32>,
    %c0_15 = arith.constant 0 : index
    %c96 = arith.constant 96 : index
    %16 = vector.load %arg1[%c0_15, %c96] : memref<8x144xf32, #tpu.memory_space<vmem>>, vector<8x16xf32>
    %c0_16 = arith.constant 0 : index
    %c64_17 = arith.constant 64 : index
    %17 = vector.load %arg2[%c0_16, %c64_17] : memref<8x96xf32, #tpu.memory_space<vmem>>, vector<8x16xf32>
    tpu.vector_store %arg2[%c0_16, %c64_17], %16 {strides = array<i32>} : memref<8x96xf32, #tpu.memory_space<vmem>>, vector<8x16xf32>,
    %c0_18 = arith.constant 0 : index
    %c112 = arith.constant 112 : index
    %18 = vector.load %arg1[%c0_18, %c112] : memref<8x144xf32, #tpu.memory_space<vmem>>, vector<8x16xf32>
    %c0_19 = arith.constant 0 : index
    %c128 = arith.constant 128 : index
    %19 = vector.load %arg1[%c0_19, %c128] : memref<8x144xf32, #tpu.memory_space<vmem>>, vector<8x16xf32>
    %20 = arith.addf %18, %19 : vector<8x16xf32>
    %cst_20 = arith.constant 5.000000e-01 : f32
    %21 = vector.broadcast %cst_20 : f32 to vector<8x16xf32>
    %22 = arith.mulf %20, %21 : vector<8x16xf32>
    %c0_21 = arith.constant 0 : index
    %c80_22 = arith.constant 80 : index
    %23 = vector.load %arg2[%c0_21, %c80_22] : memref<8x96xf32, #tpu.memory_space<vmem>>, vector<8x16xf32>
    tpu.vector_store %arg2[%c0_21, %c80_22], %22 {strides = array<i32>} : memref<8x96xf32, #tpu.memory_space<vmem>>, vector<8x16xf32>,
    return
  }
  func.func @transform_0(%arg0: i32) -> (i32, i32) {
    %c0_i32 = arith.constant 0 : i32
    %c0_i32_0 = arith.constant 0 : i32
    return %arg0, %c0_i32 : i32, i32
  }
  func.func @transform_1(%arg0: i32) -> (i32, i32) {
    %c0_i32 = arith.constant 0 : i32
    %c0_i32_0 = arith.constant 0 : i32
    return %arg0, %c0_i32 : i32, i32
  }
}

</mosaic_0001>

<llo_original>
// kernel: tpu_custom_call.1
$region0: #{tpu_custom_call.1}
  #allocation0 [shape = 'u32[]', space=smem, size = 0x4, offset = 0x4, fixed_abs, tag = 'smem constant byte address 0x4 - core index']
  #allocation1 [shape = 'u32[72,128]{1,0:T(1,128)}', space=vmem, size = 0x9000, scoped, tag = 'internal scratch']
  %s0 = inlined_call_operand.hbm [shape: f32[8,144], index: 0, kind: input, shape index: {}]
  %s1 = inlined_call_operand.hbm [shape: f32[8,96], index: 1, kind: output, shape index: {}]
  %s2 = sld [smem:[#allocation0]]
  $region18: #{tpu_custom_call.1} parent=0
    _
  %s4 = ssub.s32 1, %s2
  %s5 = scalar_select 0, %s4, %s2
  $region1: #{tpu_custom_call.1} parent=0
    #allocation2 [shape = 'u8[8192]{0}', space=vmem, size = 0x2000, scoped, tag = 'input window, operand 0, single buffered']
    #allocation3 [shape = 's32[1]{0}', space=sflag, size = 0x4, scoped, tag = 'scoped memory for tpu_custom_call.1']
    #allocation4 [shape = 's32[1]{0}', space=sflag, size = 0x4, scoped, tag = 'scoped memory for tpu_custom_call.1']
    #allocation5 [shape = 'u8[4096]{0}', space=vmem, size = 0x1000, scoped, tag = 'output window, operand 0, single buffered']
    %6 = vsyncpa [#allocation3], 0
    %7 = vsyncpa [#allocation4], 0
    // Predicated region
    $region2: #{tpu_custom_call.1} parent=1 // pred_check
      _
    $region3: #{tpu_custom_call.1} parent=1 // pred_check_branch
      %9 = sbr.rel (0) target = $region5
    $region4: #{tpu_custom_call.1} parent=1 // pred_region
      %11 = vsyncadd [#allocation3], 0
      %s13 = sshll.u32 %s0, 4
      %s14 = int_to_ptr.hbm [resolvable:$true] %s13
      %s15 = sshll.u32 [#allocation2], 4
      %s16 = int_to_ptr.vmem [resolvable:$true] %s15
      %18 = dma.hbm_to_vmem [thread:$0]  %s14, 256, %s16, [#allocation3]
    $region5: #{tpu_custom_call.1} parent=1 // pred_fallthru
      _
    // Predicated region
    $region6: #{tpu_custom_call.1} parent=1 // pred_check
      _
    $region7: #{tpu_custom_call.1} parent=1 // pred_check_branch
      %20 = sbr.rel (0) target = $region9
    $region8: #{tpu_custom_call.1} parent=1 // pred_region
      %22 = dma.done [#allocation3], 256
    $region9: #{tpu_custom_call.1} parent=1 // pred_fallthru
      _
    %v23 = vld [vmem:[#allocation2] sm:$0xff]
    %vm24 = vcmask 130048
    %25 = vst.msk [vmem:[#allocation5] sm:$0xff] %vm24, %v23
    %v26 = vld [vmem:[#allocation2] sm:$0xff]
    %28 = vrot.lane.b32.xlu0 %v26, 112
    %v29 = vpop.permute.xlu0 %28
    %v31 = vadd.f32 %v26, %v29
    %v32 = vmul.f32 %v31, 0.5
    %vm33 = vcmask 261248
    %34 = vst.msk [vmem:[#allocation5] sm:$0xff] %vm33, %v32
    %v35 = vld [vmem:[#allocation2] sm:$0xff]
    %37 = vrot.lane.b32.xlu0 %v35, 112
    %v38 = vpop.permute.xlu0 %37
    %vm40 = vcmask 392448
    %41 = vst.msk [vmem:[#allocation5] sm:$0xff] %vm40, %v38
    %v42 = vld [vmem:[#allocation2] sm:$0xff]
    %44 = vrot.lane.b32.xlu0 %v42, 112
    %v45 = vpop.permute.xlu0 %44
    %v47 = vadd.f32 %v42, %v45
    %v48 = vmul.f32 %v47, 0.5
    %50 = vrot.lane.b32.xlu0 %v48, 112
    %v51 = vpop.permute.xlu0 %50
    %vm53 = vcmask 523648
    %54 = vst.msk [vmem:[#allocation5] sm:$0xff] %vm53, %v51
    %v55 = vld [vmem:[#allocation2] sm:$0xff]
    %57 = vrot.lane.b32.xlu0 %v55, 96
    %v58 = vpop.permute.xlu0 %57
    %vm60 = vcmask 654848
    %61 = vst.msk [vmem:[#allocation5] sm:$0xff] %vm60, %v58
    %v62 = vld [vmem:[#allocation2] sm:$0xff]
    %v63 = vld [vmem:[#allocation2 + $0x8] sm:$0xff]
    %65 = vrot.lane.b32.xlu0 %v63, 112
    %v66 = vpop.permute.xlu0 %65
    %v68 = vadd.f32 %v62, %v66
    %v69 = vmul.f32 %v68, 0.5
    %71 = vrot.lane.b32.xlu0 %v69, 96
    %v72 = vpop.permute.xlu0 %71
    %vm74 = vcmask 786048
    %75 = vst.msk [vmem:[#allocation5] sm:$0xff] %vm74, %v72
    // Predicated region
    $region10: #{tpu_custom_call.1} parent=1 // pred_check
      _
    $region11: #{tpu_custom_call.1} parent=1 // pred_check_branch
      %77 = sbr.rel (0) target = $region13
    $region12: #{tpu_custom_call.1} parent=1 // pred_region
      %79 = vsyncadd [#allocation4], 0
      %s81 = sshll.u32 [#allocation5], 4
      %s82 = int_to_ptr.vmem [resolvable:$true] %s81
      %s83 = sshll.u32 %s1, 4
      %s84 = int_to_ptr.hbm [resolvable:$true] %s83
      %86 = dma.vmem_to_hbm [thread:$0]  %s82, 128, %s84, [#allocation4]
    $region13: #{tpu_custom_call.1} parent=1 // pred_fallthru
      _
    // Predicated region
    $region14: #{tpu_custom_call.1} parent=1 // pred_check
      _
    $region15: #{tpu_custom_call.1} parent=1 // pred_check_branch
      %88 = sbr.rel (0) target = $region17
    $region16: #{tpu_custom_call.1} parent=1 // pred_region
      %90 = dma.done [#allocation4], 128
    $region17: #{tpu_custom_call.1} parent=1 // pred_fallthru
      _
    %91 = vsyncpa [#allocation3], 1
    %92 = vsyncpa [#allocation4], 1

</llo_original>
